<compile_context>
chip_gen: v5e
topology: v5e:2x2
jax: 0.10.0
libtpu: 0.0.40
codegen_flags: <defaults>
</compile_context>

<pallas_src>
import functools

import jax
import jax.numpy as jnp
from jax.experimental import pallas as pl
from jax.experimental.pallas import tpu as pltpu


def _cdiv(a, b):
    return -(-a // b)


def _round_up(a, m):
    return _cdiv(a, m) * m


def _chip_config():
    """Per-generation defaults: (num TC splits, native logits-tile byte cap,
    scoped VMEM limit).  Conservative fallback for unknown chips."""
    kind = ""
    try:
        kind = jax.devices()[0].device_kind.lower()
    except Exception:
        pass
    if "v7" in kind or "tpu7" in kind:
        # 2 TensorCores / chip, 64 MiB VMEM per TC.
        return 2, 8 << 20, 48 << 20
    if "v6" in kind:
        # 1 TensorCore, 128 MiB physical VMEM (32 MiB default scoped).
        return 1, 10 << 20, 64 << 20
    if "v5" in kind and ("lite" in kind or "v5e" in kind):
        # 1 TensorCore, 16 MiB default scoped VMEM.
        return 1, 4 << 20, 32 << 20
    return 1, 4 << 20, 32 << 20


# ---------------------------------------------------------------------------
# Kernel A: channels-first layout (N, C, S) — spatial on lanes, class on
# sublanes.  Used for ndim > 2 (segmentation-style) inputs.  Grid is
# (num_splits, N, spatial_tiles_per_split).
# ---------------------------------------------------------------------------
def _ls_ce_ncs_kernel(logits_ref, labels_ref, loss_ref, cnt_ref,
                      loss_acc, cnt_acc, *, lb_pos, lb_neg, lb_ignore,
                      num_classes):
    n = pl.program_id(1)
    i = pl.program_id(2)

    @pl.when(jnp.logical_and(n == 0, i == 0))
    def _():
        loss_acc[...] = jnp.zeros_like(loss_acc)
        cnt_acc[...] = jnp.zeros_like(cnt_acc)

    x = logits_ref[...]                                     # (1, C, T) native
    t = labels_ref[...]                                     # (1, 1, T) int32
    valid = (t != lb_ignore).astype(jnp.float32)            # (1, 1, T)

    # Class-axis (sublane) reductions.  Max / one-hot compare are exact in the
    # native dtype; exp / sums run in f32.
    m = jnp.max(x, axis=1, keepdims=True).astype(jnp.float32)        # (1,1,T)
    xf = x.astype(jnp.float32)
    lse = m + jnp.log(jnp.sum(jnp.exp(xf - m), axis=1, keepdims=True))
    sum_x = jnp.sum(xf, axis=1, keepdims=True)                        # (1,1,T)

    cls = jax.lax.broadcasted_iota(jnp.int32, x.shape, 1)             # (1,C,T)
    x_t = jnp.sum(jnp.where(cls == t, xf, 0.0), axis=1, keepdims=True)

    col_loss = -((lb_pos - lb_neg) * (x_t - lse)
                 + lb_neg * (sum_x - float(num_classes) * lse))
    col_loss = col_loss * valid            # ignored / padded columns -> 0

    loss_acc[...] += jnp.sum(col_loss, axis=2)                        # (1, 1)
    cnt_acc[...] += jnp.sum(valid, axis=2)                            # (1, 1)

    @pl.when(jnp.logical_and(n == pl.num_programs(1) - 1,
                             i == pl.num_programs(2) - 1))
    def _():
        loss_ref[...] = loss_acc[...].reshape(1, 1, 1)
        cnt_ref[...] = cnt_acc[...].reshape(1, 1, 1)


# ---------------------------------------------------------------------------
# Kernel B: (rows, C) layout — class on lanes.  Used for plain 2-D
# classification inputs (typically C >= 128).  Grid is (num_splits, row_tiles).
# ---------------------------------------------------------------------------
def _ls_ce_rows_kernel(logits_ref, labels_ref, loss_ref, cnt_ref,
                       loss_acc, cnt_acc, *, lb_pos, lb_neg, lb_ignore,
                       num_classes):
    i = pl.program_id(1)

    @pl.when(i == 0)
    def _():
        loss_acc[...] = jnp.zeros_like(loss_acc)
        cnt_acc[...] = jnp.zeros_like(cnt_acc)

    x = logits_ref[...]                                     # (T, C) native
    t = labels_ref[...]                                     # (T, 1) int32
    valid = (t != lb_ignore).astype(jnp.float32)            # (T, 1)

    m = jnp.max(x, axis=1, keepdims=True).astype(jnp.float32)         # (T,1)
    xf = x.astype(jnp.float32)
    lse = m + jnp.log(jnp.sum(jnp.exp(xf - m), axis=1, keepdims=True))
    sum_x = jnp.sum(xf, axis=1, keepdims=True)

    col = jax.lax.broadcasted_iota(jnp.int32, x.shape, 1)              # (T,C)
    x_t = jnp.sum(jnp.where(col == t, xf, 0.0), axis=1, keepdims=True)

    row_loss = -((lb_pos - lb_neg) * (x_t - lse)
                 + lb_neg * (sum_x - float(num_classes) * lse))
    row_loss = row_loss * valid

    loss_acc[...] += jnp.sum(row_loss, axis=0, keepdims=True)          # (1,1)
    cnt_acc[...] += jnp.sum(valid, axis=0, keepdims=True)              # (1,1)

    @pl.when(i == pl.num_programs(1) - 1)
    def _():
        loss_ref[...] = loss_acc[...].reshape(1, 1, 1)
        cnt_ref[...] = cnt_acc[...].reshape(1, 1, 1)


def label_smooth_softmax_ce(logits, label, *, lb_pos=0.9, lb_neg=0.005,
                            lb_ignore=255, reduction='mean',
                            num_splits=None, tile_cap_bytes=None,
                            vmem_limit_bytes=None):
    """logits: (N, C) or (N, C, *spatial); label: (N,) or (N, *spatial) int."""
    if reduction != 'mean':
        # TODO(synk): reduction='none' (per-position loss map output) is not implemented in the kernel.
        raise NotImplementedError("only reduction='mean' is implemented")

    auto_splits, auto_cap, auto_vmem = _chip_config()
    num_splits = int(num_splits) if num_splits else auto_splits
    tile_cap = int(tile_cap_bytes) if tile_cap_bytes else auto_cap
    vmem_limit = int(vmem_limit_bytes) if vmem_limit_bytes else auto_vmem
    budget = 3 * vmem_limit // 4          # working-set budget with headroom

    lb_pos = float(lb_pos)
    lb_neg = float(lb_neg)
    lb_ignore = int(lb_ignore)

    c = logits.shape[1]
    itemsize = jnp.dtype(logits.dtype).itemsize

    if logits.ndim > 2:
        # -------- channels-first path: (N, C, *spatial) -> (N, C, S) --------
        n_batch = logits.shape[0]
        s = 1
        for d in logits.shape[2:]:
            s *= int(d)
        x3 = logits.reshape(n_batch, c, s)                    # free reshape
        lab3 = label.reshape(n_batch, 1, s).astype(jnp.int32)

        # VMEM sublane padding of the class axis (layout only).
        sub = {4: 8, 2: 16, 1: 32}.get(itemsize, 8)
        c_pad = _round_up(c, sub)

        # Spatial tile width: native tile <= tile_cap AND
        # (2x double-buffered input + ~2 full-tile f32 temps + label/vector
        #  buffers) <= budget.
        t_by_cap = tile_cap // (c_pad * itemsize)
        t_by_vmem = budget // (c_pad * (2 * itemsize + 8) + 256)
        per_split = _round_up(_cdiv(s, num_splits), 128)
        tile_s_max = max(128, (min(t_by_cap, t_by_vmem, per_split) // 128) * 128)

        # Rebalance so spatial padding stays < 128 * #tiles.
        s_tiles_total = num_splits * _cdiv(_cdiv(s, tile_s_max), num_splits)
        tile_s = _round_up(_cdiv(s, s_tiles_total), 128)
        tiles_per_split = s_tiles_total // num_splits
        s_pad = s_tiles_total * tile_s

        if s_pad != s:
            x3 = jnp.pad(x3, ((0, 0), (0, 0), (0, s_pad - s)))
            # padded positions get the ignore label -> contribute 0, not counted
            lab3 = jnp.pad(lab3, ((0, 0), (0, 0), (0, s_pad - s)),
                           constant_values=lb_ignore)

        kernel = functools.partial(_ls_ce_ncs_kernel, lb_pos=lb_pos,
                                   lb_neg=lb_neg, lb_ignore=lb_ignore,
                                   num_classes=c)
        loss_parts, cnt_parts = pl.pallas_call(
            kernel,
            out_shape=(jax.ShapeDtypeStruct((num_splits, 1, 1), jnp.float32),
                       jax.ShapeDtypeStruct((num_splits, 1, 1), jnp.float32)),
            grid_spec=pltpu.PrefetchScalarGridSpec(
                num_scalar_prefetch=0,
                grid=(num_splits, n_batch, tiles_per_split),
                in_specs=[
                    pl.BlockSpec(
                        (1, c, tile_s),
                        lambda p, n, i: (n, 0, p * tiles_per_split + i)),
                    pl.BlockSpec(
                        (1, 1, tile_s),
                        lambda p, n, i: (n, 0, p * tiles_per_split + i)),
                ],
                out_specs=[
                    pl.BlockSpec((1, 1, 1), lambda p, n, i: (p, 0, 0)),
                    pl.BlockSpec((1, 1, 1), lambda p, n, i: (p, 0, 0)),
                ],
                scratch_shapes=[pltpu.VMEM((1, 1), jnp.float32),
                                pltpu.VMEM((1, 1), jnp.float32)]),
            compiler_params=pltpu.CompilerParams(
                dimension_semantics=("parallel", "arbitrary", "arbitrary"),
                vmem_limit_bytes=vmem_limit),
        )(x3, lab3)
        # Note: if every position is lb_ignore this is 0/0 -> nan (same as PyTorch).
        return jnp.sum(loss_parts) / jnp.sum(cnt_parts)

    # ------------------------- (N, C) classification path -------------------
    x2 = logits
    lab = label.reshape(-1, 1).astype(jnp.int32)
    n_rows = x2.shape[0]

    c_lane = _round_up(c, 128)                 # lane padding of the class axis
    r_by_cap = tile_cap // (c_lane * itemsize)
    r_by_vmem = budget // (c_lane * (2 * itemsize + 8) + 2048)
    per_split = _round_up(_cdiv(n_rows, num_splits), 16)
    tile_rows_max = max(16, (min(r_by_cap, r_by_vmem, per_split) // 16) * 16)

    tiles_total = num_splits * _cdiv(_cdiv(n_rows, tile_rows_max), num_splits)
    tile_rows = _round_up(_cdiv(n_rows, tiles_total), 16)
    tiles_per_split = tiles_total // num_splits
    n_pad = tiles_total * tile_rows

    if n_pad != n_rows:
        x2 = jnp.pad(x2, ((0, n_pad - n_rows), (0, 0)))
        lab = jnp.pad(lab, ((0, n_pad - n_rows), (0, 0)),
                      constant_values=lb_ignore)

    kernel = functools.partial(_ls_ce_rows_kernel, lb_pos=lb_pos,
                               lb_neg=lb_neg, lb_ignore=lb_ignore,
                               num_classes=c)
    loss_parts, cnt_parts = pl.pallas_call(
        kernel,
        out_shape=(jax.ShapeDtypeStruct((num_splits, 1, 1), jnp.float32),
                   jax.ShapeDtypeStruct((num_splits, 1, 1), jnp.float32)),
        grid_spec=pltpu.PrefetchScalarGridSpec(
            num_scalar_prefetch=0,
            grid=(num_splits, tiles_per_split),
            in_specs=[
                pl.BlockSpec((tile_rows, c),
                             lambda p, i: (p * tiles_per_split + i, 0)),
                pl.BlockSpec((tile_rows, 1),
                             lambda p, i: (p * tiles_per_split + i, 0)),
            ],
            out_specs=[
                pl.BlockSpec((1, 1, 1), lambda p, i: (p, 0, 0)),
                pl.BlockSpec((1, 1, 1), lambda p, i: (p, 0, 0)),
            ],
            scratch_shapes=[pltpu.VMEM((1, 1), jnp.float32),
                            pltpu.VMEM((1, 1), jnp.float32)]),
        compiler_params=pltpu.CompilerParams(
            dimension_semantics=("parallel", "arbitrary"),
            vmem_limit_bytes=vmem_limit),
    )(x2, lab)
    return jnp.sum(loss_parts) / jnp.sum(cnt_parts)


def label_smooth_softmax_ce_ref(logits, label, *, lb_pos=0.9, lb_neg=0.005,
                                lb_ignore=255, reduction='mean'):
    """Pure-JAX reference mirroring the PyTorch forward."""
    logits = logits.astype(jnp.float32)
    logs = jax.nn.log_softmax(logits, axis=1)
    ignore = (label == lb_ignore)
    n_valid = jnp.sum(jnp.logical_not(ignore))
    lab = jnp.where(ignore, 0, label)
    c = logits.shape[1]
    one_hot = jax.nn.one_hot(lab, c, axis=1, dtype=jnp.float32)
    smooth = lb_pos * one_hot + lb_neg * (1.0 - one_hot)
    valid = jnp.expand_dims(jnp.logical_not(ignore).astype(jnp.float32), axis=1)
    smooth = smooth * valid
    loss_map = -jnp.sum(logs * smooth, axis=1)
    if reduction == 'mean':
        return jnp.sum(loss_map) / n_valid
    return loss_map


if __name__ == "__main__":
    key = jax.random.PRNGKey(0)
    k1, k2, k3, k4, k5 = jax.random.split(key, 5)

    # Segmentation-style 4-D input (channels-first path).
    N, C, H, W = 2, 4, 16, 16
    logits = jax.random.normal(k1, (N, C, H, W), dtype=jnp.float32)
    label = jax.random.randint(k2, (N, H, W), 0, C, dtype=jnp.int32)
    ignore_mask = jax.random.bernoulli(k3, 0.15, (N, H, W))
    label = jnp.where(ignore_mask, jnp.int32(255), label)

    loss = label_smooth_softmax_ce(logits, label, lb_pos=0.9, lb_neg=0.005,
                                   lb_ignore=255, reduction='mean')
    loss = jax.block_until_ready(loss)
    ref = label_smooth_softmax_ce_ref(logits, label, lb_pos=0.9, lb_neg=0.005,
                                      lb_ignore=255, reduction='mean')
    assert jnp.isfinite(loss), loss
    assert jnp.allclose(loss, ref, rtol=1e-4, atol=1e-5), (loss, ref)

    # Plain (N, C) classification input (rows path).
    N2, C2 = 16, 8
    logits2 = jax.random.normal(k4, (N2, C2), dtype=jnp.float32)
    label2 = jax.random.randint(k5, (N2,), 0, C2, dtype=jnp.int32)
    label2 = label2.at[0].set(255)       # exercise the ignore path
    loss2 = jax.block_until_ready(label_smooth_softmax_ce(logits2, label2))
    ref2 = label_smooth_softmax_ce_ref(logits2, label2)
    assert jnp.isfinite(loss2), loss2
    assert jnp.allclose(loss2, ref2, rtol=1e-4, atol=1e-5), (loss2, ref2)

    print("KERNEL_OK")
</pallas_src>

<mosaic_0001>
module attributes {stable_mosaic.version = 11 : i64} {
  func.func @_ls_ce_ncs_kernel(%arg0: i32, %arg1: i32, %arg2: i32, %arg3: memref<1x4x256xf32, #tpu.memory_space<vmem>>, %arg4: memref<1x1x256xi32, #tpu.memory_space<vmem>>, %arg5: memref<1x1x1xf32, #tpu.memory_space<vmem>>, %arg6: memref<1x1x1xf32, #tpu.memory_space<vmem>>, %arg7: memref<1x1xf32, #tpu.memory_space<vmem>>, %arg8: memref<1x1xf32, #tpu.memory_space<vmem>>) attributes {dimension_semantics = [#tpu.dimension_semantics<parallel>, #tpu.dimension_semantics<arbitrary>, #tpu.dimension_semantics<arbitrary>], iteration_bounds = array<i64: 1, 2, 1>, scalar_prefetch = 0 : i64, scratch_operands = 2 : i64, tpu.core_type = #tpu.core_type<tc>, window_params = [{transform_indices = @transform_0, window_bounds = array<i64: 1, 4, 256>}, {transform_indices = @transform_1, window_bounds = array<i64: 1, 1, 256>}, {transform_indices = @transform_2, window_bounds = array<i64: 1, 1, 1>}, {transform_indices = @transform_3, window_bounds = array<i64: 1, 1, 1>}]} {
    %c0_i32 = arith.constant 0 : i32
    %0 = arith.cmpi eq, %arg1, %c0_i32 : i32
    %c0_i32_0 = arith.constant 0 : i32
    %1 = arith.cmpi eq, %arg2, %c0_i32_0 : i32
    %2 = arith.andi %0, %1 : i1
    %3 = arith.extui %2 : i1 to i32
    %c0_i32_1 = arith.constant 0 : i32
    %4 = arith.cmpi ne, %3, %c0_i32_1 : i32
    scf.if %4 {
      %cst_27 = arith.constant 0.000000e+00 : f32
      %54 = vector.broadcast %cst_27 : f32 to vector<1x1xf32>
      %c0_28 = arith.constant 0 : index
      %c0_29 = arith.constant 0 : index
      %55 = vector.load %arg7[%c0_28, %c0_29] : memref<1x1xf32, #tpu.memory_space<vmem>>, vector<1x1xf32>
      tpu.vector_store %arg7[%c0_28, %c0_29], %54 {strides = array<i32>} : memref<1x1xf32, #tpu.memory_space<vmem>>, vector<1x1xf32>,
      %cst_30 = arith.constant 0.000000e+00 : f32
      %56 = vector.broadcast %cst_30 : f32 to vector<1x1xf32>
      %c0_31 = arith.constant 0 : index
      %c0_32 = arith.constant 0 : index
      %57 = vector.load %arg8[%c0_31, %c0_32] : memref<1x1xf32, #tpu.memory_space<vmem>>, vector<1x1xf32>
      tpu.vector_store %arg8[%c0_31, %c0_32], %56 {strides = array<i32>} : memref<1x1xf32, #tpu.memory_space<vmem>>, vector<1x1xf32>,
    } else {
    }
    %c0 = arith.constant 0 : index
    %c0_2 = arith.constant 0 : index
    %c0_3 = arith.constant 0 : index
    %5 = vector.load %arg3[%c0, %c0_2, %c0_3] : memref<1x4x256xf32, #tpu.memory_space<vmem>>, vector<1x4x256xf32>
    %c0_4 = arith.constant 0 : index
    %c0_5 = arith.constant 0 : index
    %c0_6 = arith.constant 0 : index
    %6 = vector.load %arg4[%c0_4, %c0_5, %c0_6] : memref<1x1x256xi32, #tpu.memory_space<vmem>>, vector<1x1x256xi32>
    %c255_i32 = arith.constant 255 : i32
    %7 = vector.broadcast %c255_i32 : i32 to vector<1x1x256xi32>
    %8 = arith.cmpi ne, %6, %7 : vector<1x1x256xi32>
    %9 = arith.extui %8 : vector<1x1x256xi1> to vector<1x1x256xi32>
    %10 = arith.sitofp %9 : vector<1x1x256xi32> to vector<1x1x256xf32>
    %cst = arith.constant dense<0xFF800000> : vector<1x256xf32>
    %11 = vector.multi_reduction <maximumf>, %5, %cst [1] : vector<1x4x256xf32> to vector<1x256xf32>
    %12 = vector.shape_cast %11 : vector<1x256xf32> to vector<1x1x256xf32>
    %13 = vector.broadcast %12 : vector<1x1x256xf32> to vector<1x4x256xf32>
    %14 = arith.subf %5, %13 : vector<1x4x256xf32>
    %15 = math.exp %14 : vector<1x4x256xf32>
    %cst_7 = arith.constant dense<0.000000e+00> : vector<1x256xf32>
    %16 = vector.multi_reduction <add>, %15, %cst_7 [1] : vector<1x4x256xf32> to vector<1x256xf32>
    %17 = vector.shape_cast %16 : vector<1x256xf32> to vector<1x1x256xf32>
    %18 = math.log %17 : vector<1x1x256xf32>
    %19 = arith.addf %12, %18 : vector<1x1x256xf32>
    %cst_8 = arith.constant dense<0.000000e+00> : vector<1x256xf32>
    %20 = vector.multi_reduction <add>, %5, %cst_8 [1] : vector<1x4x256xf32> to vector<1x256xf32>
    %21 = vector.shape_cast %20 : vector<1x256xf32> to vector<1x1x256xf32>
    %22 = tpu.iota {dimensions = array<i32: 1>} : vector<1x4x256xi32>
    %23 = vector.broadcast %6 : vector<1x1x256xi32> to vector<1x4x256xi32>
    %24 = arith.cmpi eq, %22, %23 : vector<1x4x256xi32>
    %cst_9 = arith.constant 0.000000e+00 : f32
    %25 = vector.broadcast %cst_9 : f32 to vector<1x4x256xf32>
    %26 = arith.select %24, %5, %25 : vector<1x4x256xi1>, vector<1x4x256xf32>
    %cst_10 = arith.constant dense<0.000000e+00> : vector<1x256xf32>
    %27 = vector.multi_reduction <add>, %26, %cst_10 [1] : vector<1x4x256xf32> to vector<1x256xf32>
    %28 = vector.shape_cast %27 : vector<1x256xf32> to vector<1x1x256xf32>
    %29 = arith.subf %28, %19 : vector<1x1x256xf32>
    %cst_11 = arith.constant 0.89499998 : f32
    %30 = vector.broadcast %cst_11 : f32 to vector<1x1x256xf32>
    %31 = arith.mulf %30, %29 : vector<1x1x256xf32>
    %cst_12 = arith.constant 4.000000e+00 : f32
    %32 = vector.broadcast %cst_12 : f32 to vector<1x1x256xf32>
    %33 = arith.mulf %32, %19 : vector<1x1x256xf32>
    %34 = arith.subf %21, %33 : vector<1x1x256xf32>
    %cst_13 = arith.constant 5.000000e-03 : f32
    %35 = vector.broadcast %cst_13 : f32 to vector<1x1x256xf32>
    %36 = arith.mulf %35, %34 : vector<1x1x256xf32>
    %37 = arith.addf %31, %36 : vector<1x1x256xf32>
    %cst_14 = arith.constant 0.000000e+00 : f32
    %38 = vector.broadcast %cst_14 : f32 to vector<1x1x256xf32>
    %39 = arith.subf %38, %37 : vector<1x1x256xf32>
    %40 = arith.mulf %39, %10 : vector<1x1x256xf32>
    %c0_15 = arith.constant 0 : index
    %c0_16 = arith.constant 0 : index
    %41 = vector.load %arg7[%c0_15, %c0_16] : memref<1x1xf32, #tpu.memory_space<vmem>>, vector<1x1xf32>
    %cst_17 = arith.constant dense<0.000000e+00> : vector<1x1xf32>
    %42 = vector.multi_reduction <add>, %40, %cst_17 [2] : vector<1x1x256xf32> to vector<1x1xf32>
    %43 = arith.addf %41, %42 : vector<1x1xf32>
    %c0_18 = arith.constant 0 : index
    %c0_19 = arith.constant 0 : index
    %44 = vector.load %arg7[%c0_18, %c0_19] : memref<1x1xf32, #tpu.memory_space<vmem>>, vector<1x1xf32>
    tpu.vector_store %arg7[%c0_18, %c0_19], %43 {strides = array<i32>} : memref<1x1xf32, #tpu.memory_space<vmem>>, vector<1x1xf32>,
    %c0_20 = arith.constant 0 : index
    %c0_21 = arith.constant 0 : index
    %45 = vector.load %arg8[%c0_20, %c0_21] : memref<1x1xf32, #tpu.memory_space<vmem>>, vector<1x1xf32>
    %cst_22 = arith.constant dense<0.000000e+00> : vector<1x1xf32>
    %46 = vector.multi_reduction <add>, %10, %cst_22 [2] : vector<1x1x256xf32> to vector<1x1xf32>
    %47 = arith.addf %45, %46 : vector<1x1xf32>
    %c0_23 = arith.constant 0 : index
    %c0_24 = arith.constant 0 : index
    %48 = vector.load %arg8[%c0_23, %c0_24] : memref<1x1xf32, #tpu.memory_space<vmem>>, vector<1x1xf32>
    tpu.vector_store %arg8[%c0_23, %c0_24], %47 {strides = array<i32>} : memref<1x1xf32, #tpu.memory_space<vmem>>, vector<1x1xf32>,
    %c1_i32 = arith.constant 1 : i32
    %49 = arith.cmpi eq, %arg1, %c1_i32 : i32
    %c0_i32_25 = arith.constant 0 : i32
    %50 = arith.cmpi eq, %arg2, %c0_i32_25 : i32
    %51 = arith.andi %49, %50 : i1
    %52 = arith.extui %51 : i1 to i32
    %c0_i32_26 = arith.constant 0 : i32
    %53 = arith.cmpi ne, %52, %c0_i32_26 : i32
    scf.if %53 {
      %c0_27 = arith.constant 0 : index
      %c0_28 = arith.constant 0 : index
      %54 = vector.load %arg7[%c0_27, %c0_28] : memref<1x1xf32, #tpu.memory_space<vmem>>, vector<1x1xf32>
      %55 = vector.shape_cast %54 : vector<1x1xf32> to vector<1x1x1xf32>
      %c0_29 = arith.constant 0 : index
      %c0_30 = arith.constant 0 : index
      %c0_31 = arith.constant 0 : index
      %56 = vector.load %arg5[%c0_29, %c0_30, %c0_31] : memref<1x1x1xf32, #tpu.memory_space<vmem>>, vector<1x1x1xf32>
      tpu.vector_store %arg5[%c0_29, %c0_30, %c0_31], %55 {strides = array<i32>} : memref<1x1x1xf32, #tpu.memory_space<vmem>>, vector<1x1x1xf32>,
      %c0_32 = arith.constant 0 : index
      %c0_33 = arith.constant 0 : index
      %57 = vector.load %arg8[%c0_32, %c0_33] : memref<1x1xf32, #tpu.memory_space<vmem>>, vector<1x1xf32>
      %58 = vector.shape_cast %57 : vector<1x1xf32> to vector<1x1x1xf32>
      %c0_34 = arith.constant 0 : index
      %c0_35 = arith.constant 0 : index
      %c0_36 = arith.constant 0 : index
      %59 = vector.load %arg6[%c0_34, %c0_35, %c0_36] : memref<1x1x1xf32, #tpu.memory_space<vmem>>, vector<1x1x1xf32>
      tpu.vector_store %arg6[%c0_34, %c0_35, %c0_36], %58 {strides = array<i32>} : memref<1x1x1xf32, #tpu.memory_space<vmem>>, vector<1x1x1xf32>,
    } else {
    }
    return
  }
  func.func @transform_0(%arg0: i32, %arg1: i32, %arg2: i32) -> (i32, i32, i32) {
    %c1_i32 = arith.constant 1 : i32
    %0 = arith.muli %arg0, %c1_i32 : i32
    %1 = arith.addi %0, %arg2 : i32
    %c0_i32 = arith.constant 0 : i32
    %c0_i32_0 = arith.constant 0 : i32
    return %arg1, %c0_i32, %1 : i32, i32, i32
  }
  func.func @transform_1(%arg0: i32, %arg1: i32, %arg2: i32) -> (i32, i32, i32) {
    %c1_i32 = arith.constant 1 : i32
    %0 = arith.muli %arg0, %c1_i32 : i32
    %1 = arith.addi %0, %arg2 : i32
    %c0_i32 = arith.constant 0 : i32
    %c0_i32_0 = arith.constant 0 : i32
    return %arg1, %c0_i32, %1 : i32, i32, i32
  }
  func.func @transform_2(%arg0: i32, %arg1: i32, %arg2: i32) -> (i32, i32, i32) {
    %c0_i32 = arith.constant 0 : i32
    %c0_i32_0 = arith.constant 0 : i32
    %c0_i32_1 = arith.constant 0 : i32
    return %arg0, %c0_i32, %c0_i32_0 : i32, i32, i32
  }
  func.func @transform_3(%arg0: i32, %arg1: i32, %arg2: i32) -> (i32, i32, i32) {
    %c0_i32 = arith.constant 0 : i32
    %c0_i32_0 = arith.constant 0 : i32
    %c0_i32_1 = arith.constant 0 : i32
    return %arg0, %c0_i32, %c0_i32_0 : i32, i32, i32
  }
}

</mosaic_0001>

<llo_original>
// kernel: tpu_custom_call.1
$region0: #{tpu_custom_call.1}
  #allocation0 [shape = 'u32[]', space=smem, size = 0x4, offset = 0x4, fixed_abs, tag = 'smem constant byte address 0x4 - core index']
  #allocation1 [shape = 'u32[72,128]{1,0:T(1,128)}', space=vmem, size = 0x9000, scoped, tag = 'internal scratch']
  #allocation2 [shape = 'f32[1,1]{1,0:T(1,128)}', space=vmem, size = 0x200, scoped, tag = 'scratch operand']
  #allocation3 [shape = 'f32[1,1]{1,0:T(1,128)}', space=vmem, size = 0x200, scoped, tag = 'scratch operand']
  %s0 = inlined_call_operand.hbm [shape: f32[2,4,256], index: 0, kind: input, shape index: {}]
  %s1 = inlined_call_operand.hbm [shape: s32[2,1,256], index: 1, kind: input, shape index: {}]
  %s2 = inlined_call_operand.hbm [shape: f32[1,1,1], index: 2, kind: output, shape index: {0}]
  %s3 = inlined_call_operand.hbm [shape: f32[1,1,1], index: 3, kind: output, shape index: {1}]
  %4 = xla_tuple %s2, %s3
  %s5 = sld [smem:[#allocation0]]
  $region65: #{tpu_custom_call.1} parent=0
    _
  %s7 = ssub.s32 1, %s5
  %s8 = scalar_select 0, %s7, %s5
  $region1: #{tpu_custom_call.1} parent=0
    #allocation4 [shape = 'u8[8192]{0}', space=vmem, size = 0x2000, scoped, tag = 'input window, operand 0']
    #allocation5 [shape = 's32[2]{0}', space=sflag, size = 0x8, scoped, tag = 'scoped memory for tpu_custom_call.1']
    #allocation6 [shape = 's32[2]{0}', space=sflag, size = 0x8, scoped, tag = 'scoped memory for tpu_custom_call.1']
    #allocation7 [shape = 'u8[2048]{0}', space=vmem, size = 0x800, scoped, tag = 'input window, operand 1']
    #allocation8 [shape = 's32[2]{0}', space=sflag, size = 0x8, scoped, tag = 'scoped memory for tpu_custom_call.1']
    #allocation9 [shape = 'u8[512]{0}', space=vmem, size = 0x400, scoped, tag = 'output window, operand 0, single buffered']
    #allocation10 [shape = 'u8[512]{0}', space=vmem, size = 0x400, scoped, tag = 'output window, operand 1, single buffered']
    #allocation11 [shape = 's32[1]{0}', space=sflag, size = 0x4, scoped, tag = 'scoped memory for tpu_custom_call.1']
    %9 = vsyncpa [#allocation5], 0
    %s10 = scalar_lea.sflag [#allocation5], 1
    %11 = vsyncpa %s10, 0
    %12 = vsyncpa [#allocation8], 0
    %s13 = scalar_lea.sflag [#allocation8], 1
    %14 = vsyncpa %s13, 0
    %15 = vsyncpa [#allocation6], 0
    %16 = vsyncpa [#allocation11], 0
    loop: start=0, step=1, limit=4
    $region2: #{tpu_custom_call.1} parent=1 // loop_pre_header
      _
    $region3: #{tpu_custom_call.1} parent=1 // loop_header
      %s18 = sphi 0, %s22
      %p19 = scmp.ge.s32.totalorder %s18, 4
      %s25 = sphi 0, %s44
      %s26 = sphi 0, %s40
      %s27 = sphi 0, %s36
      %s28 = sphi 0, %s25
      %s29 = sphi 0, %s26
      %s30 = sphi 0, %s27
      %s31 = sphi 0, %s28
      %s32 = sphi 0, %s29
      %s33 = sphi 0, %s30
      %s51 = sphi 0, %s53
      %s54 = sphi 0, %s51
      %s55 = sphi 0, %s54
      %s71 = sphi 0, %s55
      %s81 = sphi 0, %s83
      %s84 = sphi 0, %s81
      %s85 = sphi 0, %s84
      %s101 = sphi 0, %s85
      %s107 = sphi 0, %s109
      %s110 = sphi 0, %s107
      %s111 = sphi 0, %s110
      %s127 = sphi 0, %s111
      %s133 = sphi 0, %s135
      %s136 = sphi 0, %s133
      %s137 = sphi 0, %s136
      %s153 = sphi 0, %s137
    $region4: #{tpu_custom_call.1} parent=1 // loop_header_branch
      %21 = sbr.rel (%p19) target = $region8
    $region5: #{tpu_custom_call.1} parent=1 // loop_body
      %s23 = ssub.s32 %s18, 1
      %s24 = ssub.s32 %s18, 2
      %s34 = sadd.s32 1, %s27
      %p35 = scmp.ge.s32.totalorder %s34, 1
      %s36 = scalar_select %p35, 0, %s34
      %s37 = sadd.s32 1, %s26
      %s38 = scalar_select %p35, %s37, %s26
      %p39 = scmp.ge.s32.totalorder %s38, 2
      %s40 = scalar_select %p39, 0, %s38
      %s41 = sadd.s32 1, %s25
      %s42 = scalar_select %p39, %s41, %s25
      %p43 = scmp.ge.s32.totalorder %s42, 1
      %s44 = scalar_select %p43, 0, %s42
      %s45 = sadd.s32 %s25, %s27
      %s46 = sadd.s32 %s44, %s36
      %s47 = ssub.s32 %s26, %s40
      %s48 = ssub.s32 %s45, %s46
      %s49 = sor.u32 %s47, %s48
      %p50 = scmp.eq.s32.totalorder %s49, 0
      %s52 = sadd.s32 %s51, 1
      %s53 = scalar_select %p50, %s51, %s52
      %p56 = pneg %p50
      %p57 = scmp.eq.s32.totalorder %s18, 1
      %p58 = por %p56, %p57
      %p59 = scmp.ne.s32.totalorder %s51, %s54
      %p60 = scmp.eq.s32.totalorder %s18, 0
      %p61 = por %p59, %p60
      %p62 = scmp.ne.s32.totalorder %s51, %s54
      %p63 = scmp.eq.s32.totalorder %s23, 1
      %p64 = por %p62, %p63
      %p65 = scmp.ne.s32.totalorder %s54, %s55
      %p66 = scmp.eq.s32.totalorder %s23, 0
      %p67 = por %p65, %p66
      %p68 = scmp.ne.s32.totalorder %s54, %s55
      %p69 = scmp.eq.s32.totalorder %s24, 1
      %p70 = por %p68, %p69
      %p72 = scmp.ne.s32.totalorder %s55, %s71
      %p73 = scmp.eq.s32.totalorder %s24, 0
      %p74 = por %p72, %p73
      %s75 = sadd.s32 %s25, %s27
      %s76 = sadd.s32 %s44, %s36
      %s77 = ssub.s32 %s26, %s40
      %s78 = ssub.s32 %s75, %s76
      %s79 = sor.u32 %s77, %s78
      %p80 = scmp.eq.s32.totalorder %s79, 0
      %s82 = sadd.s32 %s81, 1
      %s83 = scalar_select %p80, %s81, %s82
      %p86 = pneg %p80
      %p87 = scmp.eq.s32.totalorder %s18, 1
      %p88 = por %p86, %p87
      %p89 = scmp.ne.s32.totalorder %s81, %s84
      %p90 = scmp.eq.s32.totalorder %s18, 0
      %p91 = por %p89, %p90
      %p92 = scmp.ne.s32.totalorder %s81, %s84
      %p93 = scmp.eq.s32.totalorder %s23, 1
      %p94 = por %p92, %p93
      %p95 = scmp.ne.s32.totalorder %s84, %s85
      %p96 = scmp.eq.s32.totalorder %s23, 0
      %p97 = por %p95, %p96
      %p98 = scmp.ne.s32.totalorder %s84, %s85
      %p99 = scmp.eq.s32.totalorder %s24, 1
      %p100 = por %p98, %p99
      %p102 = scmp.ne.s32.totalorder %s85, %s101
      %p103 = scmp.eq.s32.totalorder %s24, 0
      %p104 = por %p102, %p103
      %s105 = ssub.s32 %s25, %s44
      %p106 = scmp.eq.s32.totalorder %s105, 0
      %s108 = sadd.s32 %s107, 1
      %s109 = scalar_select %p106, %s107, %s108
      %p112 = pneg %p106
      %p113 = scmp.eq.s32.totalorder %s18, 1
      %p114 = por %p112, %p113
      %p115 = scmp.ne.s32.totalorder %s107, %s110
      %p116 = scmp.eq.s32.totalorder %s18, 0
      %p117 = por %p115, %p116
      %p118 = scmp.ne.s32.totalorder %s107, %s110
      %p119 = scmp.eq.s32.totalorder %s23, 1
      %p120 = por %p118, %p119
      %p121 = scmp.ne.s32.totalorder %s110, %s111
      %p122 = scmp.eq.s32.totalorder %s23, 0
      %p123 = por %p121, %p122
      %p124 = scmp.ne.s32.totalorder %s110, %s111
      %p125 = scmp.eq.s32.totalorder %s24, 1
      %p126 = por %p124, %p125
      %p128 = scmp.ne.s32.totalorder %s111, %s127
      %p129 = scmp.eq.s32.totalorder %s24, 0
      %p130 = por %p128, %p129
      %s131 = ssub.s32 %s25, %s44
      %p132 = scmp.eq.s32.totalorder %s131, 0
      %s134 = sadd.s32 %s133, 1
      %s135 = scalar_select %p132, %s133, %s134
      %p138 = pneg %p132
      %p139 = scmp.eq.s32.totalorder %s18, 1
      %p140 = por %p138, %p139
      %p141 = scmp.ne.s32.totalorder %s133, %s136
      %p142 = scmp.eq.s32.totalorder %s18, 0
      %p143 = por %p141, %p142
      %p144 = scmp.ne.s32.totalorder %s133, %s136
      %p145 = scmp.eq.s32.totalorder %s23, 1
      %p146 = por %p144, %p145
      %p147 = scmp.ne.s32.totalorder %s136, %s137
      %p148 = scmp.eq.s32.totalorder %s23, 0
      %p149 = por %p147, %p148
      %p150 = scmp.ne.s32.totalorder %s136, %s137
      %p151 = scmp.eq.s32.totalorder %s24, 1
      %p152 = por %p150, %p151
      %p154 = scmp.ne.s32.totalorder %s137, %s153
      %p155 = scmp.eq.s32.totalorder %s24, 0
      %p156 = por %p154, %p155
      %p157 = scmp.le.s32.totalorder 1, %s18
      %p158 = scmp.lt.s32.totalorder %s18, 3
      %p159 = pnand %p157, %p158
      %p160 = pneg %p159
      // Predicated region
      $region9: #{tpu_custom_call.1} parent=5 // pred_check
        _
      $region10: #{tpu_custom_call.1} parent=5 // pred_check_branch
        %162 = sbr.rel (%p159) target = $region12
      $region11: #{tpu_custom_call.1} parent=5 // pred_region
        %s163 = ssub.s32 %s18, 1
      $region12: #{tpu_custom_call.1} parent=5 // pred_fallthru
        _
      %p164 = scmp.lt.s32.totalorder %s18, 2
      // Predicated region
      $region13: #{tpu_custom_call.1} parent=5 // pred_check
        %p165 = pneg %p164
      $region14: #{tpu_custom_call.1} parent=5 // pred_check_branch
        %167 = sbr.rel (%p165) target = $region16
      $region15: #{tpu_custom_call.1} parent=5 // pred_region
        // Predicated region
        $region17: #{tpu_custom_call.1} parent=15 // pred_check
          %p168 = pneg %p61
        $region18: #{tpu_custom_call.1} parent=15 // pred_check_branch
          %170 = sbr.rel (%p168) target = $region20
        $region19: #{tpu_custom_call.1} parent=15 // pred_region
          %s171 = sand.u32 %s51, 1
          %s172 = scalar_lea.sflag [#allocation5], %s171
          %s173 = sand.u32 %s51, 1
          %s174 = smul.addr %s173, 8
          %s175 = scalar_lea.vmem [#allocation4], %s174
          %s176 = sadd.s32 %s25, %s27
          %s177 = smul.u32 2, %s176
          %179 = vsyncadd %s172, 0
          %s180 = smul.addr %s26, 2
          %s181 = sadd.s32 %s177, %s180
          %s182 = smul.addr %s181, 4
          %s183 = scalar_lea.hbm %s0, %s182
          %s185 = sshll.u32 %s183, 4
          %s186 = int_to_ptr.hbm [resolvable:$true] %s185
          %s187 = sshll.u32 %s175, 4
          %s188 = int_to_ptr.vmem [resolvable:$true] %s187
          %190 = dma.hbm_to_vmem [thread:$0]  %s186, 128, %s188, %s172
        $region20: #{tpu_custom_call.1} parent=15 // pred_fallthru
          _
        // Predicated region
        $region21: #{tpu_custom_call.1} parent=15 // pred_check
          %p191 = pneg %p91
        $region22: #{tpu_custom_call.1} parent=15 // pred_check_branch
          %193 = sbr.rel (%p191) target = $region24
        $region23: #{tpu_custom_call.1} parent=15 // pred_region
          %s194 = sand.u32 %s81, 1
          %s195 = scalar_lea.sflag [#allocation8], %s194
          %s196 = sand.u32 %s81, 1
          %s197 = smul.addr %s196, 2
          %s198 = scalar_lea.vmem [#allocation7], %s197
          %s199 = sadd.s32 %s25, %s27
          %s200 = smul.u32 2, %s199
          %202 = vsyncadd %s195, 0
          %s203 = smul.addr %s26, 2
          %s204 = sadd.s32 %s200, %s203
          %s205 = scalar_lea.hbm %s1, %s204
          %s207 = sshll.u32 %s205, 4
          %s208 = int_to_ptr.hbm [resolvable:$true] %s207
          %s209 = sshll.u32 %s198, 4
          %s210 = int_to_ptr.vmem [resolvable:$true] %s209
          %212 = dma.hbm_to_vmem [thread:$0]  %s208, 32, %s210, %s195
        $region24: #{tpu_custom_call.1} parent=15 // pred_fallthru
          _
      $region16: #{tpu_custom_call.1} parent=5 // pred_fallthru
        _
      %p213 = scmp.le.s32.totalorder 1, %s18
      %p214 = scmp.lt.s32.totalorder %s18, 3
      %p215 = pnand %p213, %p214
      %p216 = pneg %p215
      // Predicated region
      $region25: #{tpu_custom_call.1} parent=5 // pred_check
        _
      $region26: #{tpu_custom_call.1} parent=5 // pred_check_branch
        %218 = sbr.rel (%p215) target = $region28
      $region27: #{tpu_custom_call.1} parent=5 // pred_region
        %s219 = ssub.s32 %s18, 1
        %s220 = sand.u32 %s54, 1
        %s221 = scalar_lea.sflag [#allocation5], %s220
        %s222 = sand.u32 %s54, 1
        %s223 = smul.addr %s222, 8
        %s224 = scalar_lea.vmem [#allocation4], %s223
        // Predicated region
        $region29: #{tpu_custom_call.1} parent=27 // pred_check
          %p225 = pneg %p67
        $region30: #{tpu_custom_call.1} parent=27 // pred_check_branch
          %227 = sbr.rel (%p225) target = $region32
        $region31: #{tpu_custom_call.1} parent=27 // pred_region
          %229 = dma.done %s221, 128
        $region32: #{tpu_custom_call.1} parent=27 // pred_fallthru
          _
        %s230 = sand.u32 %s84, 1
        %s231 = scalar_lea.sflag [#allocation8], %s230
        %s232 = sand.u32 %s84, 1
        %s233 = smul.addr %s232, 2
        %s234 = scalar_lea.vmem [#allocation7], %s233
        // Predicated region
        $region33: #{tpu_custom_call.1} parent=27 // pred_check
          %p235 = pneg %p97
        $region34: #{tpu_custom_call.1} parent=27 // pred_check_branch
          %237 = sbr.rel (%p235) target = $region36
        $region35: #{tpu_custom_call.1} parent=27 // pred_region
          %239 = dma.done %s231, 32
        $region36: #{tpu_custom_call.1} parent=27 // pred_fallthru
          _
        %s240 = sand.u32 %s54, 1
        %s241 = scalar_lea.sflag [#allocation5], %s240
        %s242 = sand.u32 %s54, 1
        %s243 = smul.addr %s242, 8
        %s244 = scalar_lea.vmem [#allocation4], %s243
        %p245 = pneg %p67
        %p246 = pneg %p64
        %s247 = sand.u32 %s84, 1
        %s248 = scalar_lea.sflag [#allocation8], %s247
        %s249 = sand.u32 %s84, 1
        %s250 = smul.addr %s249, 2
        %s251 = scalar_lea.vmem [#allocation7], %s250
        %p252 = pneg %p97
        %p253 = pneg %p94
        %p254 = pneg %p123
        %p255 = pneg %p120
        %p256 = pneg %p149
        %p257 = pneg %p146
        %s258 = sadd.s32 %s28, %s30
        %s259 = smul.u32 2, %s258
        %s260 = sadd.s32 %s28, %s30
        %s261 = smul.u32 2, %s260
        %p262 = scmp.eq.s32.totalorder %s29, 0
        %p263 = scmp.eq.s32.totalorder %s30, 0
        %p264 = pnand %p262, %p263
        %p265 = pneg %p264
        // Predicated region
        $region37: #{tpu_custom_call.1} parent=27 // pred_check
          _
        $region38: #{tpu_custom_call.1} parent=27 // pred_check_branch
          %267 = sbr.rel (%p264) target = $region40
        $region39: #{tpu_custom_call.1} parent=27 // pred_region
          %vm268 = vcmask 0
          %269 = vst.msk [vmem:[#allocation2] sm:$0x1] %vm268, 0.0
          %270 = vst.msk [vmem:[#allocation3] sm:$0x1] %vm268, 0.0
        $region40: #{tpu_custom_call.1} parent=27 // pred_fallthru
          _
        %v271 = vld [vmem:[%s224] sm:$0xff]
        %v272 = vld [vmem:[%s234] sm:$0x3]
        %vm273 = vcmp.ne.s32.totalorder %v272, 255
        %v274 = vsel %vm273, 1, 0
        %v275 = vcvt.s32.f32 %v274
        %277 = vst [vmem:[#allocation1] ss:$2 sm:$0xff] %v271
        %v278 = vld.sshfl [vmem:[#allocation1] sm:$0xff pattern:$0x75316420]
        %v279 = vld.sshfl [vmem:[#allocation1 + $0x8] sm:$0xff pattern:$0x75316420]
        %vm282 = vcmask 1043456
        %v283 = vsel %vm282, %v278, -inf
        %v284 = vrot.slane %v283, 4
        %v285 = vmax.f32 %v283, %v284
        %v286 = vrot.slane %v285, 2
        %v287 = vmax.f32 %v285, %v286
        %v288 = vrot.slane %v287, 1
        %v289 = vmax.f32 %v287, %v288
        %v290 = vsel %vm282, %v279, -inf
        %v291 = vrot.slane %v290, 4
        %v292 = vmax.f32 %v290, %v291
        %v293 = vrot.slane %v292, 2
        %v294 = vmax.f32 %v292, %v293
        %v295 = vrot.slane %v294, 1
        %v296 = vmax.f32 %v294, %v295
        %v299 = vrot.slane %v296, 4
        %v300 = vsel %vm282, %v289, %v299
        %v302 = vsub.f32 %v271, %v300
        %v303 = vmul.f32 %v302, 1.442695
        %v304 = vpow.pop %v303
        %306 = vst [vmem:[#allocation1] ss:$2 sm:$0xff] %v304
        %v307 = vld.sshfl [vmem:[#allocation1] sm:$0xff pattern:$0x75316420]
        %v308 = vld.sshfl [vmem:[#allocation1 + $0x8] sm:$0xff pattern:$0x75316420]
        %v311 = vsel %vm282, %v307, 0.0
        %v312 = vrot.slane %v311, 4
        %v313 = vadd.f32 %v311, %v312
        %v314 = vrot.slane %v313, 2
        %v315 = vadd.f32 %v313, %v314
        %v316 = vrot.slane %v315, 1
        %v317 = vadd.f32 %v315, %v316
        %v318 = vsel %vm282, %v308, 0.0
        %v319 = vrot.slane %v318, 4
        %v320 = vadd.f32 %v318, %v319
        %v321 = vrot.slane %v320, 2
        %v322 = vadd.f32 %v320, %v321
        %v323 = vrot.slane %v322, 1
        %v324 = vadd.f32 %v322, %v323
        %v325 = vlog2.pop %v317
        %v326 = vmul.f32 %v325, 0.6931472
        %v327 = vlog2.pop %v324
        %v328 = vmul.f32 %v327, 0.6931472
        %v329 = vadd.f32 %v289, %v326
        %v330 = vadd.f32 %v296, %v328
        %331 = vst [vmem:[#allocation1] ss:$2 sm:$0xff] %v271
        %v332 = vld.sshfl [vmem:[#allocation1] sm:$0xff pattern:$0x75316420]
        %v333 = vld.sshfl [vmem:[#allocation1 + $0x8] sm:$0xff pattern:$0x75316420]
        %v336 = vsel %vm282, %v332, 0.0
        %v337 = vrot.slane %v336, 4
        %v338 = vadd.f32 %v336, %v337
        %v339 = vrot.slane %v338, 2
        %v340 = vadd.f32 %v338, %v339
        %v341 = vrot.slane %v340, 1
        %v342 = vadd.f32 %v340, %v341
        %v343 = vsel %vm282, %v333, 0.0
        %v344 = vrot.slane %v343, 4
        %v345 = vadd.f32 %v343, %v344
        %v346 = vrot.slane %v345, 2
        %v347 = vadd.f32 %v345, %v346
        %v348 = vrot.slane %v347, 1
        %v349 = vadd.f32 %v347, %v348
        %v350 = vlaneseq
        %v351 = vshrl.u32 %v350, 7
        %v352 = vperm.slane %v272, 0
        %v353 = vperm.slane %v272, 1
        %vm354 = vcmp.eq.s32.totalorder %v351, %v352
        %vm355 = vcmp.eq.s32.totalorder %v351, %v353
        %356 = vst [vmem:[#allocation1] ss:$2 sm:$0xff] %v271
        %v357 = vld.sshfl [vmem:[#allocation1] sm:$0xff pattern:$0x75316420]
        %v358 = vld.sshfl [vmem:[#allocation1 + $0x8] sm:$0xff pattern:$0x75316420]
        %v361 = vsel %vm354, %v357, 0.0
        %v362 = vsel %vm355, %v358, 0.0
        %v363 = vsel %vm282, %v361, 0.0
        %v364 = vrot.slane %v363, 4
        %v365 = vadd.f32 %v363, %v364
        %v366 = vrot.slane %v365, 2
        %v367 = vadd.f32 %v365, %v366
        %v368 = vrot.slane %v367, 1
        %v369 = vadd.f32 %v367, %v368
        %v370 = vsel %vm282, %v362, 0.0
        %v371 = vrot.slane %v370, 4
        %v372 = vadd.f32 %v370, %v371
        %v373 = vrot.slane %v372, 2
        %v374 = vadd.f32 %v372, %v373
        %v375 = vrot.slane %v374, 1
        %v376 = vadd.f32 %v374, %v375
        %v377 = vsub.f32 %v369, %v329
        %v378 = vsub.f32 %v376, %v330
        %v379 = vmul.f32 %v377, 0.895
        %v380 = vmul.f32 %v378, 0.895
        %v381 = vmul.f32 %v329, 4.0
        %v382 = vmul.f32 %v330, 4.0
        %v383 = vsub.f32 %v342, %v381
        %v384 = vsub.f32 %v349, %v382
        %v385 = vmul.f32 %v383, 0.005
        %v386 = vmul.f32 %v384, 0.005
        %v387 = vadd.f32 %v379, %v385
        %v388 = vadd.f32 %v380, %v386
        %v389 = vsub.f32 0.0, %v387
        %v390 = vsub.f32 0.0, %v388
        %v392 = vperm.slane %v275, 0
        %v393 = vperm.slane %v275, 1
        %v396 = vmul.f32 %v389, %v392
        %v397 = vmul.f32 %v390, %v393
        %v398 = vld [vmem:[#allocation2] sm:$0x1]
        %vm399 = vcmask 1040384
        %v400 = vsel %vm399, %v396, 0.0
        %v401 = vsel %vm399, %v397, 0.0
        %v402 = vadd.f32 %v400, %v401
        %403 = vadd.xlane.f32.xlu0 %v402
        %v404 = vpop.xlane.xlu0 %403
        %v405 = vadd.f32 %v398, %v404
        %vm406 = vcmask 0
        %407 = vst.msk [vmem:[#allocation2] sm:$0x1] %vm406, %v405
        %v408 = vld [vmem:[#allocation3] sm:$0x1]
        %v409 = vsel %vm399, %v392, 0.0
        %v410 = vsel %vm399, %v393, 0.0
        %v411 = vadd.f32 %v409, %v410
        %412 = vadd.xlane.f32.xlu0 %v411
        %v413 = vpop.xlane.xlu0 %412
        %v414 = vadd.f32 %v408, %v413
        %415 = vst.msk [vmem:[#allocation3] sm:$0x1] %vm406, %v414
        %p416 = scmp.eq.s32.totalorder %s29, 1
        %p417 = pnand %p416, %p263
        %p418 = pneg %p417
        // Predicated region
        $region41: #{tpu_custom_call.1} parent=27 // pred_check
          _
        $region42: #{tpu_custom_call.1} parent=27 // pred_check_branch
          %420 = sbr.rel (%p417) target = $region44
        $region43: #{tpu_custom_call.1} parent=27 // pred_region
          %v421 = vld [vmem:[#allocation2] sm:$0x1]
          %422 = vst.msk [vmem:[#allocation9] sm:$0x1] %vm406, %v421
          %v423 = vld [vmem:[#allocation3] sm:$0x1]
          %424 = vst.msk [vmem:[#allocation10] sm:$0x1] %vm406, %v423
        $region44: #{tpu_custom_call.1} parent=27 // pred_fallthru
          _
        // Predicated region
        $region45: #{tpu_custom_call.1} parent=27 // pred_check
          %p425 = pneg %p120
        $region46: #{tpu_custom_call.1} parent=27 // pred_check_branch
          %427 = sbr.rel (%p425) target = $region48
        $region47: #{tpu_custom_call.1} parent=27 // pred_region
          %429 = vsyncadd [#allocation6], 0
          %s430 = scalar_lea.hbm %s2, %s28
          %s432 = sshll.u32 [#allocation9], 4
          %s433 = int_to_ptr.vmem [resolvable:$true] %s432
          %s434 = sshll.u32 %s430, 4
          %s435 = int_to_ptr.hbm [resolvable:$true] %s434
          %437 = dma.vmem_to_hbm [thread:$0]  %s433, 16, %s435, [#allocation6]
        $region48: #{tpu_custom_call.1} parent=27 // pred_fallthru
          _
        // Predicated region
        $region49: #{tpu_custom_call.1} parent=27 // pred_check
          %p438 = pneg %p146
        $region50: #{tpu_custom_call.1} parent=27 // pred_check_branch
          %440 = sbr.rel (%p438) target = $region52
        $region51: #{tpu_custom_call.1} parent=27 // pred_region
          %442 = vsyncadd [#allocation11], 0
          %s443 = scalar_lea.hbm %s3, %s28
          %s445 = sshll.u32 [#allocation10], 4
          %s446 = int_to_ptr.vmem [resolvable:$true] %s445
          %s447 = sshll.u32 %s443, 4
          %s448 = int_to_ptr.hbm [resolvable:$true] %s447
          %450 = dma.vmem_to_hbm [thread:$0]  %s446, 16, %s448, [#allocation11]
        $region52: #{tpu_custom_call.1} parent=27 // pred_fallthru
          _
        // Predicated region
        $region53: #{tpu_custom_call.1} parent=27 // pred_check
          %p451 = pneg %p120
        $region54: #{tpu_custom_call.1} parent=27 // pred_check_branch
          %453 = sbr.rel (%p451) target = $region56
        $region55: #{tpu_custom_call.1} parent=27 // pred_region
          %455 = dma.done [#allocation6], 16
        $region56: #{tpu_custom_call.1} parent=27 // pred_fallthru
          _
        // Predicated region
        $region57: #{tpu_custom_call.1} parent=27 // pred_check
          %p456 = pneg %p146
        $region58: #{tpu_custom_call.1} parent=27 // pred_check_branch
          %458 = sbr.rel (%p456) target = $region60
        $region59: #{tpu_custom_call.1} parent=27 // pred_region
          %460 = dma.done [#allocation11], 16
        $region60: #{tpu_custom_call.1} parent=27 // pred_fallthru
          _
      $region28: #{tpu_custom_call.1} parent=5 // pred_fallthru
        _
      %p461 = scmp.le.s32.totalorder 2, %s18
      // Predicated region
      $region61: #{tpu_custom_call.1} parent=5 // pred_check
        %p462 = pneg %p461
      $region62: #{tpu_custom_call.1} parent=5 // pred_check_branch
        %464 = sbr.rel (%p462) target = $region64
      $region63: #{tpu_custom_call.1} parent=5 // pred_region
        %s465 = ssub.s32 %s18, 2
      $region64: #{tpu_custom_call.1} parent=5 // pred_fallthru
        _
    $region6: #{tpu_custom_call.1} parent=1 // loop_footer
      %s22 = sadd.s32 1, %s18
    $region7: #{tpu_custom_call.1} parent=1 // loop_footer_branch
      %17 = sbr.rel target = $region3
    $region8: #{tpu_custom_call.1} parent=1 // loop_exit
      _
    %466 = vsyncpa [#allocation5], 1
    %s467 = scalar_lea.sflag [#allocation5], 1
    %468 = vsyncpa %s467, 1
    %469 = vsyncpa [#allocation8], 1
    %s470 = scalar_lea.sflag [#allocation8], 1
    %471 = vsyncpa %s470, 1
    %472 = vsyncpa [#allocation6], 1
    %s473 = scalar_lea.sflag [#allocation6], 1
    %474 = vsyncpa %s473, 1
    %475 = vsyncpa [#allocation11], 1

</llo_original>
